<compile_context>
chip_gen: v7x
topology: tpu7x:2x2x1
jax: 0.10.0
libtpu: 0.0.40
codegen_flags: <defaults>
</compile_context>

<pallas_src>
import jax
import jax.numpy as jnp
from jax.experimental import pallas as pl
from jax.experimental.pallas import tpu as pltpu


_LANE = 128
_SUBLANE = 8


def _round_up(v, m):
    return ((v + m - 1) // m) * m


# ---------------------------------------------------------------------------
# Pallas kernel: single fused MXU matmul over a batch tile.
#   out = xu @ W_T     (xu = [x | u],  out = [dx | y], both lane-padded)
# Weights are already transposed/padded in the wrapper, so the kernel is one
# dense dot with no transposes, no masks, no slicing.
# ---------------------------------------------------------------------------
def _fused_forward_kernel(xu_ref, wt_ref, out_ref):
    out_ref[...] = jnp.dot(
        xu_ref[...], wt_ref[...], preferred_element_type=jnp.float32
    ).astype(out_ref.dtype)


# ---------------------------------------------------------------------------
# Batch-independent parameter path (a few KB of data): plain XLA so the block
# matmuls, E assembly and the LU solve fuse into one dispatch.
# TODO(synk): dense LU solve / matrix inverse has no Pallas TPU primitive; it
# stays in XLA (jax.scipy.linalg.solve) as recommended by the perf review.
# ---------------------------------------------------------------------------
def _build_fused_weight(X, Y, Bw, Cw, *, alpha, epsilon):
    f32 = jnp.float32
    nx = Y.shape[0]
    nu = Bw.shape[1]
    ny = Cw.shape[0]

    Xf = X.astype(f32)
    Yf = Y.astype(f32)
    X1 = Xf[:nx, :]          # top block rows of X
    X2 = Xf[nx:, :]          # bottom block rows of X

    # Blockwise H = X @ X.T + eps*I  (never build the full (2nx,2nx) matrix).
    H11 = X1 @ X1.T
    P = X2 @ X2.T
    F = X2 @ X1.T            # off-diagonal block: eps*I contributes nothing

    inv_a2 = 1.0 / (alpha ** 2)
    E = 0.5 * (H11 + inv_a2 * P + Yf - Yf.T)
    # eps*I on H11 and P -> 0.5*(1 + 1/alpha^2)*eps on E's diagonal.
    E = E + (0.5 * (1.0 + inv_a2) * epsilon) * jnp.eye(nx, dtype=f32)

    # LU solve (better conditioned than explicit inverse):
    #   E @ [A | Bd] = [F | B.weight]
    rhs = jnp.concatenate([F, Bw.astype(f32)], axis=1)       # (nx, nx+nu)
    ABd = jax.scipy.linalg.solve(E, rhs)
    A, Bd = ABd[:, :nx], ABd[:, nx:]

    # Fused pre-transposed weight so the kernel needs no transposes:
    #   [dx | y] = [x | u] @ W_T,   W_T = [[A.T , Cw.T],
    #                                      [Bd.T, 0   ]]   shape (nx+nu, nx+ny)
    top = jnp.concatenate([A.T, Cw.astype(f32).T], axis=1)               # (nx, nx+ny)
    bot = jnp.concatenate([Bd.T, jnp.zeros((nu, ny), f32)], axis=1)      # (nu, nx+ny)
    return jnp.concatenate([top, bot], axis=0)


# ---------------------------------------------------------------------------
# Forward wrapper.
# ---------------------------------------------------------------------------
def forward_pallas(u, x, X, Y, Bw, Cw, *, alpha=1.0, epsilon=1e-4,
                   batch_tile=256, use_pallas=True,
                   compute_dtype=jnp.float32):
    """Returns (dx, y) with the same semantics as the PyTorch module.

    use_pallas: True  -> always run the Pallas kernel for the batched matmul
                False -> pure XLA
                None  -> auto-gate: only use Pallas once the matmul is big
                         enough to amortize the custom-call overhead.
    compute_dtype: cast activations/weights of the batched matmul (e.g.
                   jnp.bfloat16 on v6e/v7x); accumulation stays f32.
    """
    nx = Y.shape[0]
    nu = Bw.shape[1]
    ny = Cw.shape[0]
    batch = x.shape[0]
    f32 = jnp.float32

    W_T = _build_fused_weight(X, Y, Bw, Cw, alpha=alpha, epsilon=epsilon)
    xu = jnp.concatenate([x.astype(f32), u.astype(f32)], axis=1)   # (B, nx+nu)

    if use_pallas is None:
        use_pallas = batch * (nx + nu) >= 128 * 128

    if not use_pallas:
        out = xu @ W_T
        return out[:, :nx], out[:, nx:nx + ny]

    # Pad feature dims to 128 lanes and the batch tile to 8 sublanes so every
    # in-kernel load/store is a dense, unmasked (8,128)-aligned tile.
    k_in, k_out = nx + nu, nx + ny
    k_in_p = _round_up(k_in, _LANE)
    k_out_p = _round_up(k_out, _LANE)

    tb = min(_round_up(batch, _SUBLANE), _round_up(batch_tile, _SUBLANE))
    b_p = _round_up(batch, tb)
    n_tiles = b_p // tb

    xu_p = jnp.pad(xu, ((0, b_p - batch), (0, k_in_p - k_in))).astype(compute_dtype)
    wt_p = jnp.pad(W_T, ((0, k_in_p - k_in), (0, k_out_p - k_out))).astype(compute_dtype)

    out_p = pl.pallas_call(
        _fused_forward_kernel,
        grid=(n_tiles,),
        out_shape=jax.ShapeDtypeStruct((b_p, k_out_p), f32),
        in_specs=[
            pl.BlockSpec((tb, k_in_p), lambda i: (i, 0)),        # activations: tiled over batch
            pl.BlockSpec((k_in_p, k_out_p), lambda i: (0, 0)),   # fused weight: resident
        ],
        out_specs=pl.BlockSpec((tb, k_out_p), lambda i: (i, 0)),
        compiler_params=pltpu.CompilerParams(
            dimension_semantics=("parallel",)),
    )(xu_p, wt_p)

    out = out_p[:batch]
    return out[:, :nx], out[:, nx:nx + ny]


# ---------------------------------------------------------------------------
# Pure-JAX reference mirroring the PyTorch forward exactly (explicit inverse,
# full H materialisation) — used only for correctness checking.
# ---------------------------------------------------------------------------
def forward_reference(u, x, X, Y, Bw, Cw, *, alpha=1.0, epsilon=1e-4):
    nx = Y.shape[0]
    H = X @ X.T + epsilon * jnp.eye(2 * nx, dtype=jnp.float32)
    H11 = H[:nx, :nx]
    P = H[nx:, nx:]
    F = H[nx:, :nx]
    E = 0.5 * (H11 + (1.0 / alpha ** 2) * P + Y - Y.T)
    Einv = jnp.linalg.inv(E)
    dx = x @ (Einv @ F).T + u @ (Einv @ Bw).T
    y = x @ Cw.T
    return dx, y


if __name__ == "__main__":
    key = jax.random.PRNGKey(0)
    kX, kY, kB, kC, ku, kx = jax.random.split(key, 6)

    # ----- config 1: small module-consistent shapes (nu=4, nx=8, ny=3, B=2) --
    nu, nx, ny, batch = 4, 8, 3, 2
    alpha, epsilon = 1.0, 1e-4

    X = jax.random.normal(kX, (2 * nx, 2 * nx), dtype=jnp.float32)
    Y = jax.random.normal(kY, (nx, nx), dtype=jnp.float32)
    Bw = jax.random.normal(kB, (nx, nu), dtype=jnp.float32) * 0.1   # B.weight (nx, nu)
    Cw = jax.random.normal(kC, (ny, nx), dtype=jnp.float32) * 0.1   # C.weight (ny, nx)
    u = jax.random.normal(ku, (batch, nu), dtype=jnp.float32)
    x = jax.random.normal(kx, (batch, nx), dtype=jnp.float32)

    dx, y = forward_pallas(u, x, X, Y, Bw, Cw, alpha=alpha, epsilon=epsilon,
                           use_pallas=True)
    jax.block_until_ready((dx, y))
    dx_ref, y_ref = forward_reference(u, x, X, Y, Bw, Cw, alpha=alpha,
                                      epsilon=epsilon)
    assert dx.shape == (batch, nx) and y.shape == (batch, ny)
    assert jnp.allclose(dx, dx_ref, rtol=1e-4, atol=1e-4), "dx mismatch (small)"
    assert jnp.allclose(y, y_ref, rtol=1e-4, atol=1e-4), "y mismatch (small)"

    # ----- config 2: exercise batch tiling (grid > 1, ragged tail), alpha<1 --
    batch2, alpha2 = 40, 0.9
    ku2, kx2 = jax.random.split(jax.random.PRNGKey(1))
    u2 = jax.random.normal(ku2, (batch2, nu), dtype=jnp.float32)
    x2 = jax.random.normal(kx2, (batch2, nx), dtype=jnp.float32)

    dx2, y2 = forward_pallas(u2, x2, X, Y, Bw, Cw, alpha=alpha2,
                             epsilon=epsilon, batch_tile=16, use_pallas=True)
    jax.block_until_ready((dx2, y2))
    dx2_ref, y2_ref = forward_reference(u2, x2, X, Y, Bw, Cw, alpha=alpha2,
                                        epsilon=epsilon)
    assert dx2.shape == (batch2, nx) and y2.shape == (batch2, ny)
    assert jnp.allclose(dx2, dx2_ref, rtol=1e-4, atol=1e-4), "dx mismatch (tiled)"
    assert jnp.allclose(y2, y2_ref, rtol=1e-4, atol=1e-4), "y mismatch (tiled)"

    print("KERNEL_OK")
</pallas_src>

<mosaic_0001>
module attributes {stable_mosaic.version = 11 : i64} {
  func.func @_fused_forward_kernel(%arg0: i32, %arg1: memref<8x128xf32, #tpu.memory_space<vmem>>, %arg2: memref<128x128xf32, #tpu.memory_space<vmem>>, %arg3: memref<8x128xf32, #tpu.memory_space<vmem>>) attributes {dimension_semantics = [#tpu.dimension_semantics<parallel>], iteration_bounds = array<i64: 1>, scalar_prefetch = 0 : i64, scratch_operands = 0 : i64, tpu.core_type = #tpu.core_type<tc>, window_params = [{transform_indices = @transform_0, window_bounds = array<i64: 8, 128>}, {pipeline_mode = #tpu.pipeline_mode<synchronous>, transform_indices = @transform_1, window_bounds = array<i64: 128, 128>}, {transform_indices = @transform_2, window_bounds = array<i64: 8, 128>}]} {
    %c0 = arith.constant 0 : index
    %c0_0 = arith.constant 0 : index
    %0 = vector.load %arg1[%c0, %c0_0] : memref<8x128xf32, #tpu.memory_space<vmem>>, vector<8x128xf32>
    %c0_1 = arith.constant 0 : index
    %c0_2 = arith.constant 0 : index
    %1 = vector.load %arg2[%c0_1, %c0_2] : memref<128x128xf32, #tpu.memory_space<vmem>>, vector<128x128xf32>
    %cst = arith.constant dense<0.000000e+00> : vector<8x128xf32>
    %2 = tpu.matmul %0, %1, %cst {dimension_numbers = #tpu.dot_dimension_numbers<[1], [0], [0], [1], [0, 0, 1, 1], [], []>} : vector<8x128xf32>, vector<128x128xf32>, vector<8x128xf32> -> vector<8x128xf32>
    %c0_3 = arith.constant 0 : index
    %c0_4 = arith.constant 0 : index
    %3 = vector.load %arg3[%c0_3, %c0_4] : memref<8x128xf32, #tpu.memory_space<vmem>>, vector<8x128xf32>
    tpu.vector_store %arg3[%c0_3, %c0_4], %2 {strides = array<i32>} : memref<8x128xf32, #tpu.memory_space<vmem>>, vector<8x128xf32>,
    return
  }
  func.func @transform_0(%arg0: i32) -> (i32, i32) {
    %c0_i32 = arith.constant 0 : i32
    %c0_i32_0 = arith.constant 0 : i32
    return %arg0, %c0_i32 : i32, i32
  }
  func.func @transform_1(%arg0: i32) -> (i32, i32) {
    %c0_i32 = arith.constant 0 : i32
    %c0_i32_0 = arith.constant 0 : i32
    %c0_i32_1 = arith.constant 0 : i32
    return %c0_i32, %c0_i32_0 : i32, i32
  }
  func.func @transform_2(%arg0: i32) -> (i32, i32) {
    %c0_i32 = arith.constant 0 : i32
    %c0_i32_0 = arith.constant 0 : i32
    return %arg0, %c0_i32 : i32, i32
  }
}

</mosaic_0001>

<llo_original>
// kernel: tpu_custom_call.1
$region0: #{tpu_custom_call.1}
  #allocation0 [shape = 'u32[]', space=smem, size = 0x4, offset = 0x4, fixed_abs, tag = 'smem constant byte address 0x4 - core index']
  #allocation1 [shape = 'u32[144,128]{1,0:T(1,128)}', space=vmem, size = 0x12000, scoped, tag = 'internal scratch']
  %s0 = inlined_call_operand.hbm [shape: f32[8,128], index: 0, kind: input, shape index: {}]
  %s1 = inlined_call_operand.hbm [shape: f32[128,128], index: 1, kind: input, shape index: {}]
  %s2 = inlined_call_operand.hbm [shape: f32[8,128], index: 2, kind: output, shape index: {}]
  %s3 = sld [smem:[#allocation0]]
  $region26: #{tpu_custom_call.1} parent=0
    _
  %s5 = ssub.s32 1, %s3
  %s6 = scalar_select 0, %s5, %s3
  $region1: #{tpu_custom_call.1} parent=0
    #allocation2 [shape = 'u8[4096]{0}', space=vmem, size = 0x1000, scoped, tag = 'input window, operand 0, single buffered']
    #allocation3 [shape = 's32[1]{0}', space=sflag, size = 0x4, scoped, tag = 'scoped memory for tpu_custom_call.1']
    #allocation4 [shape = 's32[1]{0}', space=sflag, size = 0x4, scoped, tag = 'scoped memory for tpu_custom_call.1']
    #allocation5 [shape = 'u8[65536]{0}', space=vmem, size = 0x10000, scoped, tag = 'input window, operand 1, single buffered']
    #allocation6 [shape = 's32[1]{0}', space=sflag, size = 0x4, scoped, tag = 'scoped memory for tpu_custom_call.1']
    #allocation7 [shape = 'u8[4096]{0}', space=vmem, size = 0x1000, scoped, tag = 'output window, operand 0, single buffered']
    %7 = vsyncpa [#allocation3], 0
    %8 = vsyncpa [#allocation6], 0
    %9 = vsyncpa [#allocation4], 0
    // Predicated region
    $region2: #{tpu_custom_call.1} parent=1 // pred_check
      _
    $region3: #{tpu_custom_call.1} parent=1 // pred_check_branch
      %11 = sbr.rel (0) target = $region5
    $region4: #{tpu_custom_call.1} parent=1 // pred_region
      %s13 = ssub.s32 128, 128
      %14 = vsyncadd [#allocation3], %s13
      %s16 = sshll.u32 [#allocation2], 4
      %s17 = int_to_ptr.vmem [resolvable:$true] %s16
      %19 = dma.hbm_to_vmem [thread:$0]  %s0, 128, %s17, [#allocation3]
    $region5: #{tpu_custom_call.1} parent=1 // pred_fallthru
      _
    // Predicated region
    $region6: #{tpu_custom_call.1} parent=1 // pred_check
      _
    $region7: #{tpu_custom_call.1} parent=1 // pred_check_branch
      %21 = sbr.rel (0) target = $region9
    $region8: #{tpu_custom_call.1} parent=1 // pred_region
      %s23 = ssub.s32 2048, 2048
      %24 = vsyncadd [#allocation6], %s23
      %s25 = sshll.u32 [#allocation5], 4
      %s26 = int_to_ptr.vmem [resolvable:$true] %s25
      %31 = dma.hbm_to_vmem [thread:$0]  %s1, 2048, %s26, [#allocation6], 128, 128, 8
    $region9: #{tpu_custom_call.1} parent=1 // pred_fallthru
      _
    // Predicated region
    $region10: #{tpu_custom_call.1} parent=1 // pred_check
      _
    $region11: #{tpu_custom_call.1} parent=1 // pred_check_branch
      %33 = sbr.rel (0) target = $region13
    $region12: #{tpu_custom_call.1} parent=1 // pred_region
      %34 = dma.done [#allocation3], 128
    $region13: #{tpu_custom_call.1} parent=1 // pred_fallthru
      _
    // Predicated region
    $region14: #{tpu_custom_call.1} parent=1 // pred_check
      _
    $region15: #{tpu_custom_call.1} parent=1 // pred_check_branch
      %36 = sbr.rel (0) target = $region17
    $region16: #{tpu_custom_call.1} parent=1 // pred_region
      %37 = dma.done [#allocation6], 2048
    $region17: #{tpu_custom_call.1} parent=1 // pred_fallthru
      _
    %v38 = vld [vmem:[#allocation2] sm:$0xff]
    %v39 = vld [vmem:[#allocation5] sm:$0xff]
    %v40 = vld [vmem:[#allocation5 + $0x8] sm:$0xff]
    %v41 = vld [vmem:[#allocation5 + $0x10] sm:$0xff]
    %v42 = vld [vmem:[#allocation5 + $0x18] sm:$0xff]
    %v43 = vld [vmem:[#allocation5 + $0x20] sm:$0xff]
    %v44 = vld [vmem:[#allocation5 + $0x28] sm:$0xff]
    %v45 = vld [vmem:[#allocation5 + $0x30] sm:$0xff]
    %v46 = vld [vmem:[#allocation5 + $0x38] sm:$0xff]
    %v47 = vld [vmem:[#allocation5 + $0x40] sm:$0xff]
    %v48 = vld [vmem:[#allocation5 + $0x48] sm:$0xff]
    %v49 = vld [vmem:[#allocation5 + $0x50] sm:$0xff]
    %v50 = vld [vmem:[#allocation5 + $0x58] sm:$0xff]
    %v51 = vld [vmem:[#allocation5 + $0x60] sm:$0xff]
    %v52 = vld [vmem:[#allocation5 + $0x68] sm:$0xff]
    %v53 = vld [vmem:[#allocation5 + $0x70] sm:$0xff]
    %v54 = vld [vmem:[#allocation5 + $0x78] sm:$0xff]
    %55 = vmatprep.subr.mxu0 0.0
    %56 = vmatpush1.msra.mxu0 %v39
    %57 = vmatprep.subr.mxu0 0.0
    %58 = vmatpush1.msra.mxu0 %v40
    %59 = vmatprep.subr.mxu0 0.0
    %60 = vmatpush1.msra.mxu0 %v41
    %61 = vmatprep.subr.mxu0 0.0
    %62 = vmatpush1.msra.mxu0 %v42
    %63 = vmatprep.subr.mxu0 0.0
    %64 = vmatpush1.msra.mxu0 %v43
    %65 = vmatprep.subr.mxu0 0.0
    %66 = vmatpush1.msra.mxu0 %v44
    %67 = vmatprep.subr.mxu0 0.0
    %68 = vmatpush1.msra.mxu0 %v45
    %69 = vmatprep.subr.mxu0 0.0
    %70 = vmatpush1.msra.mxu0 %v46
    %71 = vmatprep.subr.mxu0 0.0
    %72 = vmatpush1.msra.mxu0 %v47
    %73 = vmatprep.subr.mxu0 0.0
    %74 = vmatpush1.msra.mxu0 %v48
    %75 = vmatprep.subr.mxu0 0.0
    %76 = vmatpush1.msra.mxu0 %v49
    %77 = vmatprep.subr.mxu0 0.0
    %78 = vmatpush1.msra.mxu0 %v50
    %79 = vmatprep.subr.mxu0 0.0
    %80 = vmatpush1.msra.mxu0 %v51
    %81 = vmatprep.subr.mxu0 0.0
    %82 = vmatpush1.msra.mxu0 %v52
    %83 = vmatprep.subr.mxu0 0.0
    %84 = vmatpush1.msra.mxu0 %v53
    %85 = vmatprep.subr.mxu0 0.0
    %86 = vmatpush1.msra.mxu0 %v54
    %87 = vmatprep.subr.mxu0 0.0
    %88 = vmatpush1.msra.mxu0 0.0
    %89 = vmatprep.subr.mxu0 0.0
    %90 = vmatpush1.msra.mxu0 0.0
    %91 = vmatprep.subr.mxu0 0.0
    %92 = vmatpush1.msra.mxu0 0.0
    %93 = vmatprep.subr.mxu0 0.0
    %94 = vmatpush1.msra.mxu0 0.0
    %95 = vmatprep.subr.mxu0 0.0
    %96 = vmatpush1.msra.mxu0 0.0
    %97 = vmatprep.subr.mxu0 0.0
    %98 = vmatpush1.msra.mxu0 0.0
    %99 = vmatprep.subr.mxu0 0.0
    %100 = vmatpush1.msra.mxu0 0.0
    %101 = vmatprep.subr.mxu0 0.0
    %102 = vmatpush1.msra.mxu0 0.0
    %103 = vmatprep.subr.mxu0 0.0
    %104 = vmatpush1.msra.mxu0 0.0
    %105 = vmatprep.subr.mxu0 0.0
    %106 = vmatpush1.msra.mxu0 0.0
    %107 = vmatprep.subr.mxu0 0.0
    %108 = vmatpush1.msra.mxu0 0.0
    %109 = vmatprep.subr.mxu0 0.0
    %110 = vmatpush1.msra.mxu0 0.0
    %111 = vmatprep.subr.mxu0 0.0
    %112 = vmatpush1.msra.mxu0 0.0
    %113 = vmatprep.subr.mxu0 0.0
    %114 = vmatpush1.msra.mxu0 0.0
    %115 = vmatprep.subr.mxu0 0.0
    %116 = vmatpush1.msra.mxu0 0.0
    %117 = vmatprep.subr.mxu0 0.0
    %118 = vmatpush1.msra.mxu0 0.0
    %119 = vmatprep.mubr.f32.mxu0 0.0
    %120 = vmatmul.mubr.f32.gmra.mrb[0].mxu0 %v38
    %v121 = vpop.f32.mrb[0].mxu0
    %v122 = vadd.f32 0.0, %v121
    %v123 = vpop.f32.mrb[0].mxu0
    %124 = vdwg.mxu0
    %125 = vst [vmem:[#allocation7] sm:$0xff] %v122
    // Predicated region
    $region18: #{tpu_custom_call.1} parent=1 // pred_check
      _
    $region19: #{tpu_custom_call.1} parent=1 // pred_check_branch
      %127 = sbr.rel (0) target = $region21
    $region20: #{tpu_custom_call.1} parent=1 // pred_region
      %s129 = ssub.s32 128, 128
      %130 = vsyncadd [#allocation4], %s129
      %s132 = sshll.u32 [#allocation7], 4
      %s133 = int_to_ptr.vmem [resolvable:$true] %s132
      %135 = dma.vmem_to_hbm [thread:$0]  %s133, 128, %s2, [#allocation4]
    $region21: #{tpu_custom_call.1} parent=1 // pred_fallthru
      _
    // Predicated region
    $region22: #{tpu_custom_call.1} parent=1 // pred_check
      _
    $region23: #{tpu_custom_call.1} parent=1 // pred_check_branch
      %137 = sbr.rel (0) target = $region25
    $region24: #{tpu_custom_call.1} parent=1 // pred_region
      %138 = dma.done [#allocation4], 128
    $region25: #{tpu_custom_call.1} parent=1 // pred_fallthru
      _
    %139 = vsyncpa [#allocation3], 1
    %140 = vsyncpa [#allocation6], 1
    %141 = vsyncpa [#allocation4], 1

</llo_original>
